<compile_context>
chip_gen: v5e
topology: v5e:2x2
jax: 0.10.0
libtpu: 0.0.40
codegen_flags: <defaults>
</compile_context>

<pallas_src>
import functools

import jax
import jax.numpy as jnp
import numpy as np
from jax.experimental import pallas as pl
from jax.experimental.pallas import tpu as pltpu

H = 64           # hidden width of every MLP block in the reference module
LANE = 256       # slab lane width (fused encoder chain: 3*H=192, padded to 256)
DEC = 2 * H      # fused decoder chain width (128)
HEADS = 128      # lane width of the fused head matmuls
ROW_ALIGN = 16   # bf16 sublane tile is (16, 128) -> keep every block 16-row aligned


def _pad_rows(n, align=ROW_ALIGN):
    return ((n + align - 1) // align) * align


# ---------------------------------------------------------------------------
# Parameter construction (deterministic, PyTorch-Linear-style uniform init).
# Weights are stored (fan_in, fan_out) so y = x @ W + b.
# ---------------------------------------------------------------------------
def _init_linear(key, fan_in, fan_out):
    k1, k2 = jax.random.split(key)
    bound = 1.0 / (fan_in ** 0.5)
    w = jax.random.uniform(k1, (fan_in, fan_out), jnp.float32, -bound, bound)
    b = jax.random.uniform(k2, (1, fan_out), jnp.float32, -bound, bound)
    return w, b


def make_params(key, input_dim, labels_dim, z_dim, w_dim):
    keys = iter(jax.random.split(key, 32))

    def block(in_dim, head_dim):
        w1, b1 = _init_linear(next(keys), in_dim, H)
        w2, b2 = _init_linear(next(keys), H, H)
        wm, bm = _init_linear(next(keys), H, head_dim)
        wl, bl = _init_linear(next(keys), H, head_dim)
        return (w1, b1, w2, b2, wm, bm, wl, bl)

    params = {
        "xyw": block(input_dim + labels_dim, w_dim),   # encoder_xy_to_w (+heads)
        "xz":  block(input_dim, z_dim),                # encoder_x_to_z  (+heads)
        "yw":  block(labels_dim, w_dim),               # encoder_y_to_w  (+heads)
        "zwx": block(z_dim + w_dim, input_dim),        # decoder_zw_to_x (+heads)
    }
    w1, b1 = _init_linear(next(keys), z_dim, H)        # decoder_z_to_y
    w2, b2 = _init_linear(next(keys), H, H)
    w3, b3 = _init_linear(next(keys), H, 2)
    params["zy"] = (w1, b1, w2, b2, w3, b3)
    return params


# ---------------------------------------------------------------------------
# Host-side packing: all 19 Linear layers -> one (rows, 256) bf16 slab.
# ---------------------------------------------------------------------------
def pack_params(params, input_dim, labels_dim, z_dim, w_dim):
    I, L, Z, W_ = input_dim, labels_dim, z_dim, w_dim
    d_xy, d_zw = I + L, Z + W_
    d_data = d_xy + d_zw                   # packed data lanes: [x | y | eps_z | eps_w]
    n_eh = 2 * Z + 4 * W_                  # output-ordered encoder-head width
    assert 3 * H <= LANE and d_data <= LANE
    assert 2 * d_zw + n_eh <= HEADS        # fused encoder heads fit in 128 lanes
    assert 2 * I + 2 <= HEADS              # fused decoder heads fit in 128 lanes

    xyw, xz, yw = params["xyw"], params["xz"], params["yw"]
    zwx, zy = params["zwx"], params["zy"]
    A = lambda t: np.asarray(t, np.float32)
    Av = lambda t: np.asarray(t, np.float32).reshape(-1)

    # ---- fused encoder layer 1: data -> [xy->w | x->z | y->w] trunks ----------
    W_E1 = np.zeros((d_data, LANE), np.float32)
    W_E1[0:d_xy, 0:H] = A(xyw[0])
    W_E1[0:I, H:2 * H] = A(xz[0])
    W_E1[I:d_xy, 2 * H:3 * H] = A(yw[0])
    # (eps lanes d_xy:d_data stay zero -> eps never leaks into the trunks)
    b_E1 = np.zeros(LANE, np.float32)
    b_E1[0:H], b_E1[H:2 * H], b_E1[2 * H:3 * H] = Av(xyw[1]), Av(xz[1]), Av(yw[1])

    # ---- fused encoder layer 2: block-diagonal ---------------------------------
    W_E2 = np.zeros((LANE, LANE), np.float32)
    W_E2[0:H, 0:H] = A(xyw[2])
    W_E2[H:2 * H, H:2 * H] = A(xz[2])
    W_E2[2 * H:3 * H, 2 * H:3 * H] = A(yw[2])
    b_E2 = np.zeros(LANE, np.float32)
    b_E2[0:H], b_E2[H:2 * H], b_E2[2 * H:3 * H] = Av(xyw[3]), Av(xz[3]), Av(yw[3])

    # ---- fused encoder heads (128 lanes): reparam-ordered, then an
    #      output-ordered copy so the epilogue is a single contiguous slice ------
    W_EH = np.zeros((LANE, HEADS), np.float32)
    b_EH = np.zeros(HEADS, np.float32)
    c = 0
    for r0, wt, bs, width in (
        (H,     xz[4],  xz[5],  Z),    # z_mu            (reparam slot)
        (0,     xyw[4], xyw[5], W_),   # w_mu_enc        (reparam slot)
        (H,     xz[6],  xz[7],  Z),    # z_logvar        (reparam slot)
        (0,     xyw[6], xyw[7], W_),   # w_logvar_enc    (reparam slot)
        (0,     xyw[4], xyw[5], W_),   # w_mu_enc        (output-ordered copy)
        (0,     xyw[6], xyw[7], W_),   # w_logvar_enc
        (2 * H, yw[4],  yw[5],  W_),   # w_mu_prior
        (2 * H, yw[6],  yw[7],  W_),   # w_logvar_prior
        (H,     xz[4],  xz[5],  Z),    # z_mu
        (H,     xz[6],  xz[7],  Z),    # z_logvar
    ):
        W_EH[r0:r0 + H, c:c + width] = A(wt)
        b_EH[c:c + width] = Av(bs)
        c += width

    # ---- fused decoder layer 1: zw -> [zw->x | z->y] (128 lanes) ----------------
    W_D1 = np.zeros((d_zw, HEADS), np.float32)
    W_D1[:, 0:H] = A(zwx[0])
    W_D1[0:Z, H:2 * H] = A(zy[0])
    b_D1 = np.zeros(HEADS, np.float32)
    b_D1[0:H], b_D1[H:2 * H] = Av(zwx[1]), Av(zy[1])

    # ---- fused decoder layer 2: block-diagonal (128x128) ------------------------
    W_D2 = np.zeros((DEC, DEC), np.float32)
    W_D2[0:H, 0:H] = A(zwx[2])
    W_D2[H:2 * H, H:2 * H] = A(zy[2])
    b_D2 = np.zeros(HEADS, np.float32)
    b_D2[0:H], b_D2[H:2 * H] = Av(zwx[3]), Av(zy[3])

    # ---- fused decoder heads (128 lanes): [x_mu | x_logvar | y_logits] ----------
    W_DH = np.zeros((DEC, HEADS), np.float32)
    b_DH = np.zeros(HEADS, np.float32)
    c = 0
    for r0, wt, bs, width in ((0, zwx[4], zwx[5], I),
                              (0, zwx[6], zwx[7], I),
                              (H, zy[4],  zy[5],  2)):
        W_DH[r0:r0 + H, c:c + width] = A(wt)
        b_DH[c:c + width] = Av(bs)
        c += width

    # ---- all six bias vectors merged into a single 16-row block -----------------
    bias_blk = np.zeros((ROW_ALIGN, LANE), np.float32)
    bias_blk[0, :] = b_E1
    bias_blk[1, :] = b_E2
    bias_blk[2, 0:HEADS] = b_EH
    bias_blk[2, HEADS:LANE] = b_D1
    bias_blk[3, 0:HEADS] = b_D2
    bias_blk[3, HEADS:LANE] = b_DH

    # ---- combined 256x256 block: W_EH in lanes 0:128; W_D2/W_DH stacked 128:256 -
    comb = np.zeros((LANE, LANE), np.float32)
    comb[:, 0:HEADS] = W_EH
    comb[0:DEC, HEADS:LANE] = W_D2
    comb[DEC:LANE, HEADS:LANE] = W_DH

    W_D1_wide = np.zeros((d_zw, LANE), np.float32)
    W_D1_wide[:, 0:HEADS] = W_D1

    # ---- stack into one slab, every block 16-row aligned (bf16 tile) ------------
    ordered = (("E1", W_E1), ("E2", W_E2), ("D1", W_D1_wide),
               ("C", comb), ("BIAS", bias_blk))
    offsets, chunks, r = {}, [], 0
    for name, blk in ordered:
        offsets[name] = r
        nr = _pad_rows(blk.shape[0])
        padded = np.zeros((nr, LANE), np.float32)
        padded[:blk.shape[0], :] = blk
        chunks.append(padded)
        r += nr
    slab_f32 = np.concatenate(chunks, axis=0)
    slab = jnp.asarray(slab_f32).astype(jnp.bfloat16)   # ~0.27 MB vs ~1.1 MB f32
    return slab, offsets, slab_f32.shape[0]


# ---------------------------------------------------------------------------
# The kernel: whole forward graph, 7 bf16 MXU matmuls (f32 accumulation).
# ---------------------------------------------------------------------------
def csvae_kernel(data_ref, p_ref, out_ref, *, dims, off):
    input_dim, labels_dim, z_dim, w_dim = dims
    d_xy = input_dim + labels_dim
    d_zw = z_dim + w_dim
    d_data = d_xy + d_zw
    n_eh = 2 * z_dim + 4 * w_dim

    f32, bf16 = jnp.float32, jnp.bfloat16
    data = data_ref[...]                   # (B, d_data) f32 = [x | y | eps_z | eps_w]
    B = data.shape[0]

    def dot(a, w):                         # bf16 x bf16 -> f32 accumulate (MXU native)
        return jnp.dot(a.astype(bf16), w, preferred_element_type=f32)

    # ---- static, lane/tile-aligned slices of the packed bf16 parameter slab ----
    W_E1 = p_ref[off["E1"]:off["E1"] + d_data, :]              # (d_data, 256)
    W_E2 = p_ref[off["E2"]:off["E2"] + LANE, :]                # (256, 256)
    W_EH = p_ref[off["C"]:off["C"] + LANE, 0:HEADS]            # (256, 128)
    W_D1 = p_ref[off["D1"]:off["D1"] + d_zw, 0:HEADS]          # (d_zw, 128)
    W_D2 = p_ref[off["C"]:off["C"] + DEC, HEADS:LANE]          # (128, 128)
    W_DH = p_ref[off["C"] + DEC:off["C"] + LANE, HEADS:LANE]   # (128, 128)

    bias = p_ref[off["BIAS"]:off["BIAS"] + 8, :].astype(f32)   # (8, 256), one load
    b_E1 = bias[0:1, :]
    b_E2 = bias[1:2, :]
    b_EH = bias[2:3, 0:HEADS]
    b_D1 = bias[2:3, HEADS:LANE]
    b_D2 = bias[3:4, 0:HEADS]
    b_DH = bias[3:4, HEADS:LANE]

    # ---- fused encoder trunks: lanes [0:H]=xy->w, [H:2H]=x->z, [2H:3H]=y->w ----
    h1 = jnp.maximum(dot(data, W_E1) + b_E1, 0.0)
    h2 = jnp.maximum(dot(h1, W_E2) + b_E2, 0.0)
    he = dot(h2, W_EH) + b_EH
    # he lanes: [ z_mu | w_mu_enc | z_logvar | w_logvar_enc ||
    #             w_mu_enc | w_logvar_enc | w_mu_pri | w_logvar_pri | z_mu | z_logvar ]
    #             ^------ reparam-ordered ------^  ^------ output-ordered copy ------^

    # ---- reparameterize (eps from host PRNG); zw = [z | w_encoder] --------------
    mu_zw = he[:, 0:d_zw]
    logvar_zw = he[:, d_zw:2 * d_zw]
    eps_zw = data[:, d_xy:d_data]
    zw = eps_zw * jnp.exp(0.5 * logvar_zw) + mu_zw             # f32
    # NOTE: torch also reparameterizes w_prior but never uses/returns the sample,
    # so it is elided here (eps is host-supplied; no device RNG stream to keep).

    # ---- fused decoder trunks: lanes [0:H]=zw->x, [H:2H]=z->y -------------------
    g1 = jnp.maximum(dot(zw, W_D1) + b_D1, 0.0)
    g2 = jnp.maximum(dot(g1, W_D2) + b_D2, 0.0)
    hd = dot(g2, W_DH) + b_DH
    # hd lanes: [ x_mu | x_logvar | y_logits ]

    x_heads = hd[:, 0:2 * input_dim]
    logits = hd[:, 2 * input_dim:2 * input_dim + 2]
    y_pred = pl.reciprocal(1.0 + jnp.exp(-logits), approx=True)   # sigmoid via EUP
    enc_heads = he[:, 2 * d_zw:2 * d_zw + n_eh]                   # already output-ordered

    # ---- single lane-dense output store (4 contiguous pieces + zero pad) --------
    used = 2 * input_dim + d_zw + 2 + n_eh
    pad = out_ref.shape[1] - used
    out_ref[...] = jnp.concatenate(
        [x_heads, zw, y_pred, enc_heads, jnp.zeros((B, pad), f32)], axis=1)


def make_csvae_forward(input_dim, labels_dim, z_dim, w_dim, offsets, slab_rows):
    d_zw = z_dim + w_dim
    d_data = input_dim + labels_dim + d_zw
    used = 2 * input_dim + d_zw + 2 + 4 * w_dim + 2 * z_dim
    out_lanes = ((used + 127) // 128) * 128
    split_widths = (input_dim, input_dim, d_zw, 2,
                    w_dim, w_dim, w_dim, w_dim, z_dim, z_dim)

    kernel = functools.partial(
        csvae_kernel, dims=(input_dim, labels_dim, z_dim, w_dim), off=offsets)

    TB = 256  # batch tile once B is large enough to be worth pipelining

    def call_kernel(data, slab):
        B = data.shape[0]
        if B > TB and B % TB == 0:
            # Batch grid: constant index_map keeps the param slab resident (fetched
            # once), batch tiles pipeline/shard across v7x's two TensorCores.
            return pl.pallas_call(
                kernel,
                out_shape=jax.ShapeDtypeStruct((B, out_lanes), jnp.float32),
                grid=(B // TB,),
                in_specs=[pl.BlockSpec((TB, d_data), lambda i: (i, 0)),
                          pl.BlockSpec((slab_rows, LANE), lambda i: (0, 0))],
                out_specs=pl.BlockSpec((TB, out_lanes), lambda i: (i, 0)),
                compiler_params=pltpu.CompilerParams(
                    dimension_semantics=("parallel",),
                    vmem_limit_bytes=32 * 1024 * 1024),
            )(data, slab)
        # Small batch (e.g. B=8): gridless, whole working set (<0.5 MiB) in VMEM.
        vmem = pl.BlockSpec(memory_space=pltpu.MemorySpace.VMEM)
        return pl.pallas_call(
            kernel,
            out_shape=jax.ShapeDtypeStruct((B, out_lanes), jnp.float32),
            in_specs=[vmem, vmem],
            out_specs=vmem,
        )(data, slab)

    @jax.jit
    def forward_packed(data, slab):
        """Callers that already hold [x|y|eps_z|eps_w] packed get the raw slab back."""
        return call_kernel(data, slab)

    @jax.jit
    def forward(x, y, eps_z, eps_w, slab):
        data = jnp.concatenate([x, y, eps_z, eps_w], axis=1).astype(jnp.float32)
        out = call_kernel(data, slab)
        pieces, o = [], 0
        for w in split_widths:
            pieces.append(out[:, o:o + w])
            o += w
        # (x_mu, x_logvar, zw, y_pred, w_mu_enc, w_logvar_enc,
        #  w_mu_prior, w_logvar_prior, z_mu, z_logvar)
        return tuple(pieces)

    return forward, forward_packed


# ---------------------------------------------------------------------------
# Pure-JAX references (unfused) for correctness checking.
# ---------------------------------------------------------------------------
def _csvae_graph(x, y, eps_z, eps_w, params, linear, mlp2, sigmoid):
    xyw, xz, yw = params["xyw"], params["xz"], params["yw"]
    zwx, zy = params["zwx"], params["zy"]

    xy = jnp.concatenate([x, y], axis=1)
    h_xy = mlp2(xy, *xyw[:4])
    w_mu_enc, w_logvar_enc = linear(h_xy, xyw[4], xyw[5]), linear(h_xy, xyw[6], xyw[7])
    h_x = mlp2(x, *xz[:4])
    z_mu, z_logvar = linear(h_x, xz[4], xz[5]), linear(h_x, xz[6], xz[7])
    h_y = mlp2(y, *yw[:4])
    w_mu_pri, w_logvar_pri = linear(h_y, yw[4], yw[5]), linear(h_y, yw[6], yw[7])

    w_enc = eps_w * jnp.exp(0.5 * w_logvar_enc) + w_mu_enc
    z = eps_z * jnp.exp(0.5 * z_logvar) + z_mu
    zw = jnp.concatenate([z, w_enc], axis=1)

    h_zw = mlp2(zw, *zwx[:4])
    x_mu, x_logvar = linear(h_zw, zwx[4], zwx[5]), linear(h_zw, zwx[6], zwx[7])
    h_zy = mlp2(z, *zy[:4])
    y_pred = sigmoid(linear(h_zy, zy[4], zy[5]))
    return (x_mu, x_logvar, zw, y_pred, w_mu_enc, w_logvar_enc,
            w_mu_pri, w_logvar_pri, z_mu, z_logvar)


def csvae_reference_f32(x, y, eps_z, eps_w, params):
    P = jax.lax.Precision.HIGHEST

    def linear(a, w, b):
        return jnp.dot(a, w, precision=P) + b

    def mlp2(a, w1, b1, w2, b2):
        return jax.nn.relu(linear(jax.nn.relu(linear(a, w1, b1)), w2, b2))

    return _csvae_graph(x, y, eps_z, eps_w, params, linear, mlp2, jax.nn.sigmoid)


def csvae_reference_bf16(x, y, eps_z, eps_w, params):
    """Same graph with weights/biases/dot-inputs quantized exactly like the kernel."""
    bf16, f32 = jnp.bfloat16, jnp.float32

    def linear(a, w, b):
        return (jnp.dot(a.astype(bf16), jnp.asarray(w, f32).astype(bf16),
                        preferred_element_type=f32)
                + jnp.asarray(b, f32).astype(bf16).astype(f32))

    def mlp2(a, w1, b1, w2, b2):
        return jax.nn.relu(linear(jax.nn.relu(linear(a, w1, b1)), w2, b2))

    return _csvae_graph(x, y, eps_z, eps_w, params, linear, mlp2, jax.nn.sigmoid)


if __name__ == "__main__":
    # Swiss-roll-ish sizes: 3-D points, scalar label, 2-D z / w latents.
    B, INPUT_DIM, LABELS_DIM, Z_DIM, W_DIM = 8, 3, 1, 2, 2

    root = jax.random.PRNGKey(0)
    k_x, k_y, k_ez, k_ew, k_p = jax.random.split(root, 5)

    x = jax.random.normal(k_x, (B, INPUT_DIM), jnp.float32)
    y = (jax.random.uniform(k_y, (B, LABELS_DIM)) > 0.5).astype(jnp.float32)
    eps_z = jax.random.normal(k_ez, (B, Z_DIM), jnp.float32)
    eps_w = jax.random.normal(k_ew, (B, W_DIM), jnp.float32)

    params = make_params(k_p, INPUT_DIM, LABELS_DIM, Z_DIM, W_DIM)
    param_slab, offsets, slab_rows = pack_params(params, INPUT_DIM, LABELS_DIM,
                                                 Z_DIM, W_DIM)

    forward, _ = make_csvae_forward(INPUT_DIM, LABELS_DIM, Z_DIM, W_DIM,
                                    offsets, slab_rows)
    outs = jax.block_until_ready(forward(x, y, eps_z, eps_w, param_slab))

    refs_q = jax.block_until_ready(csvae_reference_bf16(x, y, eps_z, eps_w, params))
    refs_f = jax.block_until_ready(csvae_reference_f32(x, y, eps_z, eps_w, params))

    names = ["x_mu", "x_logvar", "zw", "y_pred", "w_mu_encoder", "w_logvar_encoder",
             "w_mu_prior", "w_logvar_prior", "z_mu", "z_logvar"]
    for name, got, want_q, want_f in zip(names, outs, refs_q, refs_f):
        assert got.shape == want_q.shape, (name, got.shape, want_q.shape)
        # tight check vs. a reference that mirrors the kernel's bf16 quantization
        np.testing.assert_allclose(np.asarray(got), np.asarray(want_q),
                                   rtol=5e-3, atol=5e-3,
                                   err_msg=name + " [bf16-matched]")
        # envelope check vs. the full-f32 reference (bf16 weight quantization drift)
        np.testing.assert_allclose(np.asarray(got), np.asarray(want_f),
                                   rtol=3e-2, atol=3e-2,
                                   err_msg=name + " [f32 envelope]")

    print("KERNEL_OK")
</pallas_src>

<mosaic_0001>
module attributes {stable_mosaic.version = 11 : i64} {
  func.func @csvae_kernel(%arg0: memref<8x8xf32, #tpu.memory_space<vmem>>, %arg1: memref<560x256xbf16, #tpu.memory_space<vmem>>, %arg2: memref<8x128xf32, #tpu.memory_space<vmem>>) attributes {dimension_semantics = [], scalar_prefetch = 0 : i64, scratch_operands = 0 : i64, tpu.core_type = #tpu.core_type<tc>} {
    %c0 = arith.constant 0 : index
    %c0_0 = arith.constant 0 : index
    %0 = vector.load %arg0[%c0, %c0_0] : memref<8x8xf32, #tpu.memory_space<vmem>>, vector<8x8xf32>
    %c0_1 = arith.constant 0 : index
    %c0_2 = arith.constant 0 : index
    %1 = vector.load %arg1[%c0_1, %c0_2] : memref<560x256xbf16, #tpu.memory_space<vmem>>, vector<8x256xbf16>
    %c16 = arith.constant 16 : index
    %c0_3 = arith.constant 0 : index
    %2 = vector.load %arg1[%c16, %c0_3] : memref<560x256xbf16, #tpu.memory_space<vmem>>, vector<256x256xbf16>
    %c288 = arith.constant 288 : index
    %c0_4 = arith.constant 0 : index
    %3 = vector.load %arg1[%c288, %c0_4] : memref<560x256xbf16, #tpu.memory_space<vmem>>, vector<256x128xbf16>
    %c272 = arith.constant 272 : index
    %c0_5 = arith.constant 0 : index
    %4 = vector.load %arg1[%c272, %c0_5] : memref<560x256xbf16, #tpu.memory_space<vmem>>, vector<4x128xbf16>
    %c288_6 = arith.constant 288 : index
    %c128 = arith.constant 128 : index
    %5 = vector.load %arg1[%c288_6, %c128] : memref<560x256xbf16, #tpu.memory_space<vmem>>, vector<128x128xbf16>
    %c416 = arith.constant 416 : index
    %c128_7 = arith.constant 128 : index
    %6 = vector.load %arg1[%c416, %c128_7] : memref<560x256xbf16, #tpu.memory_space<vmem>>, vector<128x128xbf16>
    %c544 = arith.constant 544 : index
    %c0_8 = arith.constant 0 : index
    %7 = vector.load %arg1[%c544, %c0_8] : memref<560x256xbf16, #tpu.memory_space<vmem>>, vector<8x256xbf16>
    %8 = arith.extf %7 : vector<8x256xbf16> to vector<8x256xf32>
    %9 = vector.extract_strided_slice %8 {offsets = [0, 0], sizes = [1, 256], strides = [1, 1]} : vector<8x256xf32> to vector<1x256xf32>
    %10 = vector.extract_strided_slice %8 {offsets = [1, 0], sizes = [1, 256], strides = [1, 1]} : vector<8x256xf32> to vector<1x256xf32>
    %11 = vector.extract_strided_slice %8 {offsets = [2, 0], sizes = [1, 128], strides = [1, 1]} : vector<8x256xf32> to vector<1x128xf32>
    %12 = vector.extract_strided_slice %8 {offsets = [2, 128], sizes = [1, 128], strides = [1, 1]} : vector<8x256xf32> to vector<1x128xf32>
    %13 = vector.extract_strided_slice %8 {offsets = [3, 0], sizes = [1, 128], strides = [1, 1]} : vector<8x256xf32> to vector<1x128xf32>
    %14 = vector.extract_strided_slice %8 {offsets = [3, 128], sizes = [1, 128], strides = [1, 1]} : vector<8x256xf32> to vector<1x128xf32>
    %15 = arith.truncf %0 : vector<8x8xf32> to vector<8x8xbf16>
    %cst = arith.constant dense<0.000000e+00> : vector<8x256xf32>
    %16 = tpu.matmul %15, %1, %cst {dimension_numbers = #tpu.dot_dimension_numbers<[1], [0], [0], [1], [0, 0, 1, 1], [], []>} : vector<8x8xbf16>, vector<8x256xbf16>, vector<8x256xf32> -> vector<8x256xf32>
    %17 = vector.broadcast %9 : vector<1x256xf32> to vector<8x256xf32>
    %18 = arith.addf %16, %17 : vector<8x256xf32>
    %cst_9 = arith.constant 0.000000e+00 : f32
    %19 = vector.broadcast %cst_9 : f32 to vector<8x256xf32>
    %20 = arith.maximumf %18, %19 : vector<8x256xf32>
    %21 = arith.truncf %20 : vector<8x256xf32> to vector<8x256xbf16>
    %cst_10 = arith.constant dense<0.000000e+00> : vector<8x256xf32>
    %22 = tpu.matmul %21, %2, %cst_10 {dimension_numbers = #tpu.dot_dimension_numbers<[1], [0], [0], [1], [0, 0, 1, 1], [], []>} : vector<8x256xbf16>, vector<256x256xbf16>, vector<8x256xf32> -> vector<8x256xf32>
    %23 = vector.broadcast %10 : vector<1x256xf32> to vector<8x256xf32>
    %24 = arith.addf %22, %23 : vector<8x256xf32>
    %cst_11 = arith.constant 0.000000e+00 : f32
    %25 = vector.broadcast %cst_11 : f32 to vector<8x256xf32>
    %26 = arith.maximumf %24, %25 : vector<8x256xf32>
    %27 = arith.truncf %26 : vector<8x256xf32> to vector<8x256xbf16>
    %cst_12 = arith.constant dense<0.000000e+00> : vector<8x128xf32>
    %28 = tpu.matmul %27, %3, %cst_12 {dimension_numbers = #tpu.dot_dimension_numbers<[1], [0], [0], [1], [0, 0, 1, 1], [], []>} : vector<8x256xbf16>, vector<256x128xbf16>, vector<8x128xf32> -> vector<8x128xf32>
    %29 = vector.broadcast %11 : vector<1x128xf32> to vector<8x128xf32>
    %30 = arith.addf %28, %29 : vector<8x128xf32>
    %31 = vector.extract_strided_slice %30 {offsets = [0, 0], sizes = [8, 4], strides = [1, 1]} : vector<8x128xf32> to vector<8x4xf32>
    %32 = vector.extract_strided_slice %30 {offsets = [0, 4], sizes = [8, 4], strides = [1, 1]} : vector<8x128xf32> to vector<8x4xf32>
    %33 = vector.extract_strided_slice %0 {offsets = [0, 4], sizes = [8, 4], strides = [1, 1]} : vector<8x8xf32> to vector<8x4xf32>
    %cst_13 = arith.constant 5.000000e-01 : f32
    %34 = vector.broadcast %cst_13 : f32 to vector<8x4xf32>
    %35 = arith.mulf %34, %32 : vector<8x4xf32>
    %36 = math.exp %35 : vector<8x4xf32>
    %37 = arith.mulf %33, %36 : vector<8x4xf32>
    %38 = arith.addf %37, %31 : vector<8x4xf32>
    %39 = arith.truncf %38 : vector<8x4xf32> to vector<8x4xbf16>
    %cst_14 = arith.constant dense<0.000000e+00> : vector<8x128xf32>
    %40 = tpu.matmul %39, %4, %cst_14 {dimension_numbers = #tpu.dot_dimension_numbers<[1], [0], [0], [1], [0, 0, 1, 1], [], []>} : vector<8x4xbf16>, vector<4x128xbf16>, vector<8x128xf32> -> vector<8x128xf32>
    %41 = vector.broadcast %12 : vector<1x128xf32> to vector<8x128xf32>
    %42 = arith.addf %40, %41 : vector<8x128xf32>
    %cst_15 = arith.constant 0.000000e+00 : f32
    %43 = vector.broadcast %cst_15 : f32 to vector<8x128xf32>
    %44 = arith.maximumf %42, %43 : vector<8x128xf32>
    %45 = arith.truncf %44 : vector<8x128xf32> to vector<8x128xbf16>
    %cst_16 = arith.constant dense<0.000000e+00> : vector<8x128xf32>
    %46 = tpu.matmul %45, %5, %cst_16 {dimension_numbers = #tpu.dot_dimension_numbers<[1], [0], [0], [1], [0, 0, 1, 1], [], []>} : vector<8x128xbf16>, vector<128x128xbf16>, vector<8x128xf32> -> vector<8x128xf32>
    %47 = vector.broadcast %13 : vector<1x128xf32> to vector<8x128xf32>
    %48 = arith.addf %46, %47 : vector<8x128xf32>
    %cst_17 = arith.constant 0.000000e+00 : f32
    %49 = vector.broadcast %cst_17 : f32 to vector<8x128xf32>
    %50 = arith.maximumf %48, %49 : vector<8x128xf32>
    %51 = arith.truncf %50 : vector<8x128xf32> to vector<8x128xbf16>
    %cst_18 = arith.constant dense<0.000000e+00> : vector<8x128xf32>
    %52 = tpu.matmul %51, %6, %cst_18 {dimension_numbers = #tpu.dot_dimension_numbers<[1], [0], [0], [1], [0, 0, 1, 1], [], []>} : vector<8x128xbf16>, vector<128x128xbf16>, vector<8x128xf32> -> vector<8x128xf32>
    %53 = vector.broadcast %14 : vector<1x128xf32> to vector<8x128xf32>
    %54 = arith.addf %52, %53 : vector<8x128xf32>
    %55 = vector.extract_strided_slice %54 {offsets = [0, 0], sizes = [8, 6], strides = [1, 1]} : vector<8x128xf32> to vector<8x6xf32>
    %56 = vector.extract_strided_slice %54 {offsets = [0, 6], sizes = [8, 2], strides = [1, 1]} : vector<8x128xf32> to vector<8x2xf32>
    %cst_19 = arith.constant 0.000000e+00 : f32
    %57 = vector.broadcast %cst_19 : f32 to vector<8x2xf32>
    %58 = arith.subf %57, %56 : vector<8x2xf32>
    %59 = math.exp %58 : vector<8x2xf32>
    %cst_20 = arith.constant 1.000000e+00 : f32
    %60 = vector.broadcast %cst_20 : f32 to vector<8x2xf32>
    %61 = arith.addf %60, %59 : vector<8x2xf32>
    %62 = tpu.reciprocal %61 {approx = true} : vector<8x2xf32> -> vector<8x2xf32>
    %63 = vector.extract_strided_slice %30 {offsets = [0, 8], sizes = [8, 12], strides = [1, 1]} : vector<8x128xf32> to vector<8x12xf32>
    %cst_21 = arith.constant 0.000000e+00 : f32
    %64 = vector.broadcast %cst_21 : f32 to vector<8x104xf32>
    %65 = tpu.concatenate %55, %38, %62, %63, %64 in 1 : vector<8x6xf32>, vector<8x4xf32>, vector<8x2xf32>, vector<8x12xf32>, vector<8x104xf32> -> vector<8x128xf32>
    %c0_22 = arith.constant 0 : index
    %c0_23 = arith.constant 0 : index
    %66 = vector.load %arg2[%c0_22, %c0_23] : memref<8x128xf32, #tpu.memory_space<vmem>>, vector<8x128xf32>
    tpu.vector_store %arg2[%c0_22, %c0_23], %65 {strides = array<i32>} : memref<8x128xf32, #tpu.memory_space<vmem>>, vector<8x128xf32>,
    return
  }
}

</mosaic_0001>

<llo_original>
// kernel: forward.1
$region0: #{forward.1}
  #allocation0 [shape = 'u32[]', space=smem, size = 0x4, offset = 0x4, fixed_abs, tag = 'smem constant byte address 0x4 - core index']
  #allocation1 [shape = 'u32[72,128]{1,0:T(1,128)}', space=vmem, size = 0x9000, scoped, tag = 'internal scratch']
  %s0 = inlined_call_operand.vmem [shape: f32[8,8], index: 0, kind: input, shape index: {}]
  %s1 = inlined_call_operand.hbm [shape: bf16[560,256], index: 1, kind: input, shape index: {}]
  %s2 = inlined_call_operand.vmem [shape: f32[8,128], index: 2, kind: output, shape index: {}]
  %s3 = sld [smem:[#allocation0]]
  $region22: #{forward.1} parent=0
    _
  %s5 = ssub.s32 1, %s3
  %s6 = scalar_select 0, %s5, %s3
  $region1: #{forward.1} parent=0
    #allocation2 [shape = 'u8[286720]{0}', space=vmem, size = 0x46000, scoped, tag = 'input window, operand 1, single buffered']
    #allocation3 [shape = 's32[1]{0}', space=sflag, size = 0x4, scoped, tag = 'scoped memory for forward.1']
    %7 = vsyncpa [#allocation3], 0
    // Predicated region
    $region2: #{forward.1} parent=1 // pred_check
      _
    $region3: #{forward.1} parent=1 // pred_check_branch
      %9 = sbr.rel (0) target = $region5
    $region4: #{forward.1} parent=1 // pred_region
      _
    $region5: #{forward.1} parent=1 // pred_fallthru
      _
    // Predicated region
    $region6: #{forward.1} parent=1 // pred_check
      _
    $region7: #{forward.1} parent=1 // pred_check_branch
      %11 = sbr.rel (0) target = $region9
    $region8: #{forward.1} parent=1 // pred_region
      %13 = vsyncadd [#allocation3], 0
      %s14 = sshll.u32 %s1, 4
      %s15 = int_to_ptr.hbm [resolvable:$true] %s14
      %s16 = sshll.u32 [#allocation2], 4
      %s17 = int_to_ptr.vmem [resolvable:$true] %s16
      %22 = dma.hbm_to_vmem [thread:$0]  %s15, 8960, %s17, [#allocation3], 128, 128, 8
    $region9: #{forward.1} parent=1 // pred_fallthru
      _
    // Predicated region
    $region10: #{forward.1} parent=1 // pred_check
      _
    $region11: #{forward.1} parent=1 // pred_check_branch
      %24 = sbr.rel (0) target = $region13
    $region12: #{forward.1} parent=1 // pred_region
      %26 = dma.done [#allocation3], 8960
    $region13: #{forward.1} parent=1 // pred_fallthru
      _
    %v28 = vld [vmem:[%s0] sm:$0xff]
    %v29 = vld [vmem:[#allocation2] sm:$0xff]
    %v30 = vld [vmem:[#allocation2 + $0x10] sm:$0xff]
    %v31 = vld [vmem:[#allocation2 + $0x18] sm:$0xff]
    %v32 = vld [vmem:[#allocation2 + $0x20] sm:$0xff]
    %v33 = vld [vmem:[#allocation2 + $0x28] sm:$0xff]
    %v34 = vld [vmem:[#allocation2 + $0x30] sm:$0xff]
    %v35 = vld [vmem:[#allocation2 + $0x38] sm:$0xff]
    %v36 = vld [vmem:[#allocation2 + $0x40] sm:$0xff]
    %v37 = vld [vmem:[#allocation2 + $0x48] sm:$0xff]
    %v38 = vld [vmem:[#allocation2 + $0x50] sm:$0xff]
    %v39 = vld [vmem:[#allocation2 + $0x58] sm:$0xff]
    %v40 = vld [vmem:[#allocation2 + $0x60] sm:$0xff]
    %v41 = vld [vmem:[#allocation2 + $0x68] sm:$0xff]
    %v42 = vld [vmem:[#allocation2 + $0x70] sm:$0xff]
    %v43 = vld [vmem:[#allocation2 + $0x78] sm:$0xff]
    %v44 = vld [vmem:[#allocation2 + $0x80] sm:$0xff]
    %v45 = vld [vmem:[#allocation2 + $0x88] sm:$0xff]
    %v46 = vld [vmem:[#allocation2 + $0x90] sm:$0xff]
    %v47 = vld [vmem:[#allocation2 + $0x98] sm:$0xff]
    %v48 = vld [vmem:[#allocation2 + $0xa0] sm:$0xff]
    %v49 = vld [vmem:[#allocation2 + $0xa8] sm:$0xff]
    %v50 = vld [vmem:[#allocation2 + $0xb0] sm:$0xff]
    %v51 = vld [vmem:[#allocation2 + $0xb8] sm:$0xff]
    %v52 = vld [vmem:[#allocation2 + $0xc0] sm:$0xff]
    %v53 = vld [vmem:[#allocation2 + $0xc8] sm:$0xff]
    %v54 = vld [vmem:[#allocation2 + $0xd0] sm:$0xff]
    %v55 = vld [vmem:[#allocation2 + $0xd8] sm:$0xff]
    %v56 = vld [vmem:[#allocation2 + $0xe0] sm:$0xff]
    %v57 = vld [vmem:[#allocation2 + $0xe8] sm:$0xff]
    %v58 = vld [vmem:[#allocation2 + $0xf0] sm:$0xff]
    %v59 = vld [vmem:[#allocation2 + $0xf8] sm:$0xff]
    %v60 = vld [vmem:[#allocation2 + $0x100] sm:$0xff]
    %v61 = vld [vmem:[#allocation2 + $0x108] sm:$0xff]
    %v62 = vld [vmem:[#allocation2 + $0x120] sm:$0xf]
    %v63 = vld [vmem:[#allocation2 + $0x128] sm:$0xf]
    %v64 = vld [vmem:[#allocation2 + $0x130] sm:$0xf]
    %v65 = vld [vmem:[#allocation2 + $0x138] sm:$0xf]
    %v66 = vld [vmem:[#allocation2 + $0x140] sm:$0xf]
    %v67 = vld [vmem:[#allocation2 + $0x148] sm:$0xf]
    %v68 = vld [vmem:[#allocation2 + $0x150] sm:$0xf]
    %v69 = vld [vmem:[#allocation2 + $0x158] sm:$0xf]
    %v70 = vld [vmem:[#allocation2 + $0x160] sm:$0xf]
    %v71 = vld [vmem:[#allocation2 + $0x168] sm:$0xf]
    %v72 = vld [vmem:[#allocation2 + $0x170] sm:$0xf]
    %v73 = vld [vmem:[#allocation2 + $0x178] sm:$0xf]
    %v74 = vld [vmem:[#allocation2 + $0x180] sm:$0xf]
    %v75 = vld [vmem:[#allocation2 + $0x188] sm:$0xf]
    %v76 = vld [vmem:[#allocation2 + $0x190] sm:$0xf]
    %v77 = vld [vmem:[#allocation2 + $0x198] sm:$0xf]
    %v78 = vld [vmem:[#allocation2 + $0x1a0] sm:$0xf]
    %v79 = vld [vmem:[#allocation2 + $0x1a8] sm:$0xf]
    %v80 = vld [vmem:[#allocation2 + $0x1b0] sm:$0xf]
    %v81 = vld [vmem:[#allocation2 + $0x1b8] sm:$0xf]
    %v82 = vld [vmem:[#allocation2 + $0x1c0] sm:$0xf]
    %v83 = vld [vmem:[#allocation2 + $0x1c8] sm:$0xf]
    %v84 = vld [vmem:[#allocation2 + $0x1d0] sm:$0xf]
    %v85 = vld [vmem:[#allocation2 + $0x1d8] sm:$0xf]
    %v86 = vld [vmem:[#allocation2 + $0x1e0] sm:$0xf]
    %v87 = vld [vmem:[#allocation2 + $0x1e8] sm:$0xf]
    %v88 = vld [vmem:[#allocation2 + $0x1f0] sm:$0xf]
    %v89 = vld [vmem:[#allocation2 + $0x1f8] sm:$0xf]
    %v90 = vld [vmem:[#allocation2 + $0x200] sm:$0xf]
    %v91 = vld [vmem:[#allocation2 + $0x208] sm:$0xf]
    %v92 = vld [vmem:[#allocation2 + $0x210] sm:$0xf]
    %v93 = vld [vmem:[#allocation2 + $0x218] sm:$0xf]
    %v94 = vld [vmem:[#allocation2 + $0x110] sm:$0x3]
    %v95 = vld [vmem:[#allocation2 + $0x124] sm:$0xf]
    %v96 = vld [vmem:[#allocation2 + $0x12c] sm:$0xf]
    %v97 = vld [vmem:[#allocation2 + $0x134] sm:$0xf]
    %v98 = vld [vmem:[#allocation2 + $0x13c] sm:$0xf]
    %v99 = vld [vmem:[#allocation2 + $0x144] sm:$0xf]
    %v100 = vld [vmem:[#allocation2 + $0x14c] sm:$0xf]
    %v101 = vld [vmem:[#allocation2 + $0x154] sm:$0xf]
    %v102 = vld [vmem:[#allocation2 + $0x15c] sm:$0xf]
    %v103 = vld [vmem:[#allocation2 + $0x164] sm:$0xf]
    %v104 = vld [vmem:[#allocation2 + $0x16c] sm:$0xf]
    %v105 = vld [vmem:[#allocation2 + $0x174] sm:$0xf]
    %v106 = vld [vmem:[#allocation2 + $0x17c] sm:$0xf]
    %v107 = vld [vmem:[#allocation2 + $0x184] sm:$0xf]
    %v108 = vld [vmem:[#allocation2 + $0x18c] sm:$0xf]
    %v109 = vld [vmem:[#allocation2 + $0x194] sm:$0xf]
    %v110 = vld [vmem:[#allocation2 + $0x19c] sm:$0xf]
    %v111 = vld [vmem:[#allocation2 + $0x1a4] sm:$0xf]
    %v112 = vld [vmem:[#allocation2 + $0x1ac] sm:$0xf]
    %v113 = vld [vmem:[#allocation2 + $0x1b4] sm:$0xf]
    %v114 = vld [vmem:[#allocation2 + $0x1bc] sm:$0xf]
    %v115 = vld [vmem:[#allocation2 + $0x1c4] sm:$0xf]
    %v116 = vld [vmem:[#allocation2 + $0x1cc] sm:$0xf]
    %v117 = vld [vmem:[#allocation2 + $0x1d4] sm:$0xf]
    %v118 = vld [vmem:[#allocation2 + $0x1dc] sm:$0xf]
    %v119 = vld [vmem:[#allocation2 + $0x1e4] sm:$0xf]
    %v120 = vld [vmem:[#allocation2 + $0x1ec] sm:$0xf]
    %v121 = vld [vmem:[#allocation2 + $0x1f4] sm:$0xf]
    %v122 = vld [vmem:[#allocation2 + $0x1fc] sm:$0xf]
    %v123 = vld [vmem:[#allocation2 + $0x204] sm:$0xf]
    %v124 = vld [vmem:[#allocation2 + $0x20c] sm:$0xf]
    %v125 = vld [vmem:[#allocation2 + $0x214] sm:$0xf]
    %v126 = vld [vmem:[#allocation2 + $0x21c] sm:$0xf]
    %v127 = vld [vmem:[#allocation2 + $0x220] sm:$0xff]
    %v128 = vunpack.c.l.bf16 %v127
    %v129 = vunpack.c.h.bf16 %v127
    %v130 = vpack.c.bf16 %v28, %v28
    %v131 = vperm.slane %v128, 0
    %v132 = vperm.slane %v129, 0
    %v134 = vunpack.c.l.b16 %v29
    %v135 = vunpack.c.h.b16 %v29
    %v136 = vpack.c.b16 %v134, %v134
    %v137 = vpack.c.b16 %v135, %v135
    %vm138 = vcmask 64512
    %v140 = vsel %vm138, %v130, 0
    %vm142 = vcmask 1043456
    %v144 = vsel %vm142, %v136, 0
    %v147 = vsel %vm142, %v137, 0
    %149 = vmatpush.bf16.msra.mxu0 0
    %150 = vmatpush.bf16.msra.mxu0 0
    %151 = vmatpush.bf16.msra.mxu0 0
    %152 = vmatpush.bf16.msra.mxu0 0
    %153 = vmatpush.bf16.msra.mxu0 0
    %154 = vmatpush.bf16.msra.mxu0 0
    %155 = vmatpush.bf16.msra.mxu0 0
    %156 = vmatpush.bf16.msra.mxu0 %v144
    %157 = vmatmul.bf16.gmra.mxu0 %v140
    %v158 = vpop.f32.mrf.mxu0
    %v159 = vadd.f32 %v131, %v158
    %v160 = vpop.f32.mrf.mxu0
    %161 = vdwg.mxu0
    %162 = vmatpush.bf16.msra.mxu0 0
    %163 = vmatpush.bf16.msra.mxu0 0
    %164 = vmatpush.bf16.msra.mxu0 0
    %165 = vmatpush.bf16.msra.mxu0 0
    %166 = vmatpush.bf16.msra.mxu0 0
    %167 = vmatpush.bf16.msra.mxu0 0
    %168 = vmatpush.bf16.msra.mxu0 0
    %169 = vmatpush.bf16.msra.mxu0 %v147
    %170 = vmatmul.bf16.gmra.mxu0 %v140
    %v171 = vpop.f32.mrf.mxu0
    %v172 = vadd.f32 %v132, %v171
    %v173 = vpop.f32.mrf.mxu0
    %174 = vdwg.mxu0
    %v175 = vmax.f32 %v159, 0.0
    %v176 = vmax.f32 %v172, 0.0
    %v177 = vpack.c.bf16 %v175, %v175
    %v178 = vpack.c.bf16 %v176, %v176
    %v179 = vperm.slane %v128, 1
    %v180 = vperm.slane %v129, 1
    %v213 = vunpack.c.l.b16 %v30
    %v214 = vunpack.c.h.b16 %v30
    %v215 = vunpack.c.l.b16 %v31
    %v216 = vunpack.c.h.b16 %v31
    %v217 = vunpack.c.l.b16 %v32
    %v218 = vunpack.c.h.b16 %v32
    %v219 = vunpack.c.l.b16 %v33
    %v220 = vunpack.c.h.b16 %v33
    %v221 = vunpack.c.l.b16 %v34
    %v222 = vunpack.c.h.b16 %v34
    %v223 = vunpack.c.l.b16 %v35
    %v224 = vunpack.c.h.b16 %v35
    %v225 = vunpack.c.l.b16 %v36
    %v226 = vunpack.c.h.b16 %v36
    %v227 = vunpack.c.l.b16 %v37
    %v228 = vunpack.c.h.b16 %v37
    %v229 = vunpack.c.l.b16 %v38
    %v230 = vunpack.c.h.b16 %v38
    %v231 = vunpack.c.l.b16 %v39
    %v232 = vunpack.c.h.b16 %v39
    %v233 = vunpack.c.l.b16 %v40
    %v234 = vunpack.c.h.b16 %v40
    %v235 = vunpack.c.l.b16 %v41
    %v236 = vunpack.c.h.b16 %v41
    %v237 = vunpack.c.l.b16 %v42
    %v238 = vunpack.c.h.b16 %v42
    %v239 = vunpack.c.l.b16 %v43
    %v240 = vunpack.c.h.b16 %v43
    %v241 = vunpack.c.l.b16 %v44
    %v242 = vunpack.c.h.b16 %v44
    %v243 = vunpack.c.l.b16 %v45
    %v244 = vunpack.c.h.b16 %v45
    %v245 = vunpack.c.l.b16 %v46
    %v246 = vunpack.c.h.b16 %v46
    %v247 = vunpack.c.l.b16 %v47
    %v248 = vunpack.c.h.b16 %v47
    %v249 = vunpack.c.l.b16 %v48
    %v250 = vunpack.c.h.b16 %v48
    %v251 = vunpack.c.l.b16 %v49
    %v252 = vunpack.c.h.b16 %v49
    %v253 = vunpack.c.l.b16 %v50
    %v254 = vunpack.c.h.b16 %v50
    %v255 = vunpack.c.l.b16 %v51
    %v256 = vunpack.c.h.b16 %v51
    %v257 = vunpack.c.l.b16 %v52
    %v258 = vunpack.c.h.b16 %v52
    %v259 = vunpack.c.l.b16 %v53
    %v260 = vunpack.c.h.b16 %v53
    %v261 = vunpack.c.l.b16 %v54
    %v262 = vunpack.c.h.b16 %v54
    %v263 = vunpack.c.l.b16 %v55
    %v264 = vunpack.c.h.b16 %v55
    %v265 = vunpack.c.l.b16 %v56
    %v266 = vunpack.c.h.b16 %v56
    %v267 = vunpack.c.l.b16 %v57
    %v268 = vunpack.c.h.b16 %v57
    %v269 = vunpack.c.l.b16 %v58
    %v270 = vunpack.c.h.b16 %v58
    %v271 = vunpack.c.l.b16 %v59
    %v272 = vunpack.c.h.b16 %v59
    %v273 = vunpack.c.l.b16 %v60
    %v274 = vunpack.c.h.b16 %v60
    %v275 = vunpack.c.l.b16 %v61
    %v276 = vunpack.c.h.b16 %v61
    %v277 = vpack.c.b16 %v215, %v213
    %v278 = vpack.c.b16 %v216, %v214
    %v279 = vpack.c.b16 %v219, %v217
    %v280 = vpack.c.b16 %v220, %v218
    %v281 = vpack.c.b16 %v223, %v221
    %v282 = vpack.c.b16 %v224, %v222
    %v283 = vpack.c.b16 %v227, %v225
    %v284 = vpack.c.b16 %v228, %v226
    %v285 = vpack.c.b16 %v231, %v229
    %v286 = vpack.c.b16 %v232, %v230
    %v287 = vpack.c.b16 %v235, %v233
    %v288 = vpack.c.b16 %v236, %v234
    %v289 = vpack.c.b16 %v239, %v237
    %v290 = vpack.c.b16 %v240, %v238
    %v291 = vpack.c.b16 %v243, %v241
    %v292 = vpack.c.b16 %v244, %v242
    %v293 = vpack.c.b16 %v247, %v245
    %v294 = vpack.c.b16 %v248, %v246
    %v295 = vpack.c.b16 %v251, %v249
    %v296 = vpack.c.b16 %v252, %v250
    %v297 = vpack.c.b16 %v255, %v253
    %v298 = vpack.c.b16 %v256, %v254
    %v299 = vpack.c.b16 %v259, %v257
    %v300 = vpack.c.b16 %v260, %v258
    %v301 = vpack.c.b16 %v263, %v261
    %v302 = vpack.c.b16 %v264, %v262
    %v303 = vpack.c.b16 %v267, %v265
    %v304 = vpack.c.b16 %v268, %v266
    %v305 = vpack.c.b16 %v271, %v269
    %v306 = vpack.c.b16 %v272, %v270
    %v307 = vpack.c.b16 %v275, %v273
    %v308 = vpack.c.b16 %v276, %v274
    %341 = vmatpush.bf16.msra.mxu0 %v291
    %342 = vmatpush.bf16.msra.mxu0 %v289
    %343 = vmatpush.bf16.msra.mxu0 %v287
    %344 = vmatpush.bf16.msra.mxu0 %v285
    %345 = vmatpush.bf16.msra.mxu0 %v283
    %346 = vmatpush.bf16.msra.mxu0 %v281
    %347 = vmatpush.bf16.msra.mxu0 %v279
    %348 = vmatpush.bf16.msra.mxu0 %v277
    %349 = vmatmul.bf16.gmra.mxu0 %v177
    %v350 = vpop.f32.mrf.mxu0
    %v351 = vadd.f32 %v179, %v350
    %v352 = vpop.f32.mrf.mxu0
    %353 = vdwg.mxu0
    %354 = vmatpush.bf16.msra.mxu0 %v307
    %355 = vmatpush.bf16.msra.mxu0 %v305
    %356 = vmatpush.bf16.msra.mxu0 %v303
    %357 = vmatpush.bf16.msra.mxu0 %v301
    %358 = vmatpush.bf16.msra.mxu0 %v299
    %359 = vmatpush.bf16.msra.mxu0 %v297
    %360 = vmatpush.bf16.msra.mxu0 %v295
    %361 = vmatpush.bf16.msra.mxu0 %v293
    %362 = vmatmul.bf16.gmra.mxu0 %v178
    %v363 = vpop.f32.mrf.mxu0
    %v364 = vadd.f32 %v351, %v363
    %v365 = vpop.f32.mrf.mxu0
    %366 = vdwg.mxu0
    %367 = vmatpush.bf16.msra.mxu0 %v292
    %368 = vmatpush.bf16.msra.mxu0 %v290
    %369 = vmatpush.bf16.msra.mxu0 %v288
    %370 = vmatpush.bf16.msra.mxu0 %v286
    %371 = vmatpush.bf16.msra.mxu0 %v284
    %372 = vmatpush.bf16.msra.mxu0 %v282
    %373 = vmatpush.bf16.msra.mxu0 %v280
    %374 = vmatpush.bf16.msra.mxu0 %v278
    %375 = vmatmul.bf16.gmra.mxu0 %v177
    %v376 = vpop.f32.mrf.mxu0
    %v377 = vadd.f32 %v180, %v376
    %v378 = vpop.f32.mrf.mxu0
    %379 = vdwg.mxu0
    %380 = vmatpush.bf16.msra.mxu0 %v308
    %381 = vmatpush.bf16.msra.mxu0 %v306
    %382 = vmatpush.bf16.msra.mxu0 %v304
    %383 = vmatpush.bf16.msra.mxu0 %v302
    %384 = vmatpush.bf16.msra.mxu0 %v300
    %385 = vmatpush.bf16.msra.mxu0 %v298
    %386 = vmatpush.bf16.msra.mxu0 %v296
    %387 = vmatpush.bf16.msra.mxu0 %v294
    %388 = vmatmul.bf16.gmra.mxu0 %v178
    %v389 = vpop.f32.mrf.mxu0
    %v390 = vadd.f32 %v377, %v389
    %v391 = vpop.f32.mrf.mxu0
    %392 = vdwg.mxu0
    %v393 = vmax.f32 %v364, 0.0
    %v394 = vmax.f32 %v390, 0.0
    %v395 = vpack.c.bf16 %v393, %v393
    %v396 = vpack.c.bf16 %v394, %v394
    %v397 = vperm.slane %v128, 2
    %v430 = vunpack.c.l.b16 %v62
    %v431 = vunpack.c.l.b16 %v63
    %v432 = vunpack.c.l.b16 %v64
    %v433 = vunpack.c.l.b16 %v65
    %v434 = vunpack.c.l.b16 %v66
    %v435 = vunpack.c.l.b16 %v67
    %v436 = vunpack.c.l.b16 %v68
    %v437 = vunpack.c.l.b16 %v69
    %v438 = vunpack.c.l.b16 %v70
    %v439 = vunpack.c.l.b16 %v71
    %v440 = vunpack.c.l.b16 %v72
    %v441 = vunpack.c.l.b16 %v73
    %v442 = vunpack.c.l.b16 %v74
    %v443 = vunpack.c.l.b16 %v75
    %v444 = vunpack.c.l.b16 %v76
    %v445 = vunpack.c.l.b16 %v77
    %v446 = vunpack.c.l.b16 %v78
    %v447 = vunpack.c.l.b16 %v79
    %v448 = vunpack.c.l.b16 %v80
    %v449 = vunpack.c.l.b16 %v81
    %v450 = vunpack.c.l.b16 %v82
    %v451 = vunpack.c.l.b16 %v83
    %v452 = vunpack.c.l.b16 %v84
    %v453 = vunpack.c.l.b16 %v85
    %v454 = vunpack.c.l.b16 %v86
    %v455 = vunpack.c.l.b16 %v87
    %v456 = vunpack.c.l.b16 %v88
    %v457 = vunpack.c.l.b16 %v89
    %v458 = vunpack.c.l.b16 %v90
    %v459 = vunpack.c.l.b16 %v91
    %v460 = vunpack.c.l.b16 %v92
    %v461 = vunpack.c.l.b16 %v93
    %v462 = vpack.c.b16 %v431, %v430
    %v463 = vpack.c.b16 %v433, %v432
    %v464 = vpack.c.b16 %v435, %v434
    %v465 = vpack.c.b16 %v437, %v436
    %v466 = vpack.c.b16 %v439, %v438
    %v467 = vpack.c.b16 %v441, %v440
    %v468 = vpack.c.b16 %v443, %v442
    %v469 = vpack.c.b16 %v445, %v444
    %v470 = vpack.c.b16 %v447, %v446
    %v471 = vpack.c.b16 %v449, %v448
    %v472 = vpack.c.b16 %v451, %v450
    %v473 = vpack.c.b16 %v453, %v452
    %v474 = vpack.c.b16 %v455, %v454
    %v475 = vpack.c.b16 %v457, %v456
    %v476 = vpack.c.b16 %v459, %v458
    %v477 = vpack.c.b16 %v461, %v460
    %494 = vmatpush.bf16.msra.mxu0 %v469
    %495 = vmatpush.bf16.msra.mxu0 %v468
    %496 = vmatpush.bf16.msra.mxu0 %v467
    %497 = vmatpush.bf16.msra.mxu0 %v466
    %498 = vmatpush.bf16.msra.mxu0 %v465
    %499 = vmatpush.bf16.msra.mxu0 %v464
    %500 = vmatpush.bf16.msra.mxu0 %v463
    %501 = vmatpush.bf16.msra.mxu0 %v462
    %502 = vmatmul.bf16.gmra.mxu0 %v395
    %v503 = vpop.f32.mrf.mxu0
    %v504 = vadd.f32 %v397, %v503
    %v505 = vpop.f32.mrf.mxu0
    %506 = vdwg.mxu0
    %507 = vmatpush.bf16.msra.mxu0 %v477
    %508 = vmatpush.bf16.msra.mxu0 %v476
    %509 = vmatpush.bf16.msra.mxu0 %v475
    %510 = vmatpush.bf16.msra.mxu0 %v474
    %511 = vmatpush.bf16.msra.mxu0 %v473
    %512 = vmatpush.bf16.msra.mxu0 %v472
    %513 = vmatpush.bf16.msra.mxu0 %v471
    %514 = vmatpush.bf16.msra.mxu0 %v470
    %515 = vmatmul.bf16.gmra.mxu0 %v396
    %v516 = vpop.f32.mrf.mxu0
    %v517 = vadd.f32 %v504, %v516
    %v518 = vpop.f32.mrf.mxu0
    %519 = vdwg.mxu0
    %v520 = vmul.f32 %v517, 0.5
    %v521 = vmul.f32 %v520, 1.442695
    %v522 = vpow.pop %v521
    %v523 = vmul.f32 %v28, %v522
    %525 = vrot.lane.b32.xlu0 %v517, 4
    %v526 = vpop.permute.xlu0 %525
    %v528 = vadd.f32 %v523, %v526
    %v529 = vpack.c.bf16 %v528, %v528
    %v530 = vperm.slane %v129, 2
    %532 = vrot.lane.b32.xlu0 %v529, 124
    %v533 = vpop.permute.xlu0 %532
    %vm534 = vcmask 31744
    %v536 = vsel %vm534, %v533, 0
    %vm538 = vcmask 1041408
    %v540 = vsel %vm538, %v94, 0
    %542 = vmatpush.bf16.msra.mxu0 0
    %543 = vmatpush.bf16.msra.mxu0 0
    %544 = vmatpush.bf16.msra.mxu0 0
    %545 = vmatpush.bf16.msra.mxu0 0
    %546 = vmatpush.bf16.msra.mxu0 0
    %547 = vmatpush.bf16.msra.mxu0 0
    %548 = vmatpush.bf16.msra.mxu0 0
    %549 = vmatpush.bf16.msra.mxu0 %v540
    %550 = vmatmul.bf16.gmra.mxu0 %v536
    %v551 = vpop.f32.mrf.mxu0
    %v552 = vadd.f32 %v530, %v551
    %v553 = vpop.f32.mrf.mxu0
    %554 = vdwg.mxu0
    %v555 = vmax.f32 %v552, 0.0
    %v556 = vpack.c.bf16 %v555, %v555
    %v557 = vperm.slane %v128, 3
    %v574 = vunpack.c.l.b16 %v95
    %v575 = vunpack.c.l.b16 %v96
    %v576 = vunpack.c.l.b16 %v97
    %v577 = vunpack.c.l.b16 %v98
    %v578 = vunpack.c.l.b16 %v99
    %v579 = vunpack.c.l.b16 %v100
    %v580 = vunpack.c.l.b16 %v101
    %v581 = vunpack.c.l.b16 %v102
    %v582 = vunpack.c.l.b16 %v103
    %v583 = vunpack.c.l.b16 %v104
    %v584 = vunpack.c.l.b16 %v105
    %v585 = vunpack.c.l.b16 %v106
    %v586 = vunpack.c.l.b16 %v107
    %v587 = vunpack.c.l.b16 %v108
    %v588 = vunpack.c.l.b16 %v109
    %v589 = vunpack.c.l.b16 %v110
    %v590 = vpack.c.b16 %v575, %v574
    %v591 = vpack.c.b16 %v577, %v576
    %v592 = vpack.c.b16 %v579, %v578
    %v593 = vpack.c.b16 %v581, %v580
    %v594 = vpack.c.b16 %v583, %v582
    %v595 = vpack.c.b16 %v585, %v584
    %v596 = vpack.c.b16 %v587, %v586
    %v597 = vpack.c.b16 %v589, %v588
    %606 = vmatpush.bf16.msra.mxu0 %v597
    %607 = vmatpush.bf16.msra.mxu0 %v596
    %608 = vmatpush.bf16.msra.mxu0 %v595
    %609 = vmatpush.bf16.msra.mxu0 %v594
    %610 = vmatpush.bf16.msra.mxu0 %v593
    %611 = vmatpush.bf16.msra.mxu0 %v592
    %612 = vmatpush.bf16.msra.mxu0 %v591
    %613 = vmatpush.bf16.msra.mxu0 %v590
    %614 = vmatmul.bf16.gmra.mxu0 %v556
    %v615 = vpop.f32.mrf.mxu0
    %v616 = vadd.f32 %v557, %v615
    %v617 = vpop.f32.mrf.mxu0
    %618 = vdwg.mxu0
    %v619 = vmax.f32 %v616, 0.0
    %v620 = vpack.c.bf16 %v619, %v619
    %v621 = vperm.slane %v129, 3
    %v638 = vunpack.c.l.b16 %v111
    %v639 = vunpack.c.l.b16 %v112
    %v640 = vunpack.c.l.b16 %v113
    %v641 = vunpack.c.l.b16 %v114
    %v642 = vunpack.c.l.b16 %v115
    %v643 = vunpack.c.l.b16 %v116
    %v644 = vunpack.c.l.b16 %v117
    %v645 = vunpack.c.l.b16 %v118
    %v646 = vunpack.c.l.b16 %v119
    %v647 = vunpack.c.l.b16 %v120
    %v648 = vunpack.c.l.b16 %v121
    %v649 = vunpack.c.l.b16 %v122
    %v650 = vunpack.c.l.b16 %v123
    %v651 = vunpack.c.l.b16 %v124
    %v652 = vunpack.c.l.b16 %v125
    %v653 = vunpack.c.l.b16 %v126
    %v654 = vpack.c.b16 %v639, %v638
    %v655 = vpack.c.b16 %v641, %v640
    %v656 = vpack.c.b16 %v643, %v642
    %v657 = vpack.c.b16 %v645, %v644
    %v658 = vpack.c.b16 %v647, %v646
    %v659 = vpack.c.b16 %v649, %v648
    %v660 = vpack.c.b16 %v651, %v650
    %v661 = vpack.c.b16 %v653, %v652
    %670 = vmatpush.bf16.msra.mxu0 %v661
    %671 = vmatpush.bf16.msra.mxu0 %v660
    %672 = vmatpush.bf16.msra.mxu0 %v659
    %673 = vmatpush.bf16.msra.mxu0 %v658
    %674 = vmatpush.bf16.msra.mxu0 %v657
    %675 = vmatpush.bf16.msra.mxu0 %v656
    %676 = vmatpush.bf16.msra.mxu0 %v655
    %677 = vmatpush.bf16.msra.mxu0 %v654
    %678 = vmatmul.bf16.gmra.mxu0 %v620
    %v679 = vpop.f32.mrf.mxu0
    %v680 = vadd.f32 %v621, %v679
    %v681 = vpop.f32.mrf.mxu0
    %682 = vdwg.mxu0
    %v683 = vsub.f32 0.0, %v680
    %v684 = vmul.f32 %v683, 1.442695
    %v685 = vpow.pop %v684
    %v686 = vadd.f32 %v685, 1.0
    %v687 = vrcp.pop %v686
    %689 = vrot.lane.b32.xlu0 %v528, 2
    %v690 = vpop.permute.xlu0 %689
    %693 = vrot.lane.b32.xlu0 %v687, 4
    %v694 = vpop.permute.xlu0 %693
    %vm696 = vcmask 48128
    %v697 = vsel %vm696, %v680, %v690
    %vm698 = vcmask 80896
    %v699 = vsel %vm698, %v697, %v694
    %vm700 = vcmask 97280
    %v701 = vsel %vm700, %v699, %v526
    %vm702 = vcmask 195584
    %v703 = vsel %vm702, %v701, 0.0
    %704 = vst [vmem:[%s2] sm:$0xff] %v703
    // Predicated region
    $region14: #{forward.1} parent=1 // pred_check
      _
    $region15: #{forward.1} parent=1 // pred_check_branch
      %706 = sbr.rel (0) target = $region17
    $region16: #{forward.1} parent=1 // pred_region
      _
    $region17: #{forward.1} parent=1 // pred_fallthru
      _
    // Predicated region
    $region18: #{forward.1} parent=1 // pred_check
      _
    $region19: #{forward.1} parent=1 // pred_check_branch
      %708 = sbr.rel (0) target = $region21
    $region20: #{forward.1} parent=1 // pred_region
      _
    $region21: #{forward.1} parent=1 // pred_fallthru
      _
    %709 = vsyncpa [#allocation3], 1

</llo_original>
